<compile_context>
chip_gen: v6e
topology: v6e:2x2x1
jax: 0.10.0
libtpu: 0.0.40
codegen_flags: <defaults>
</compile_context>

<pallas_src>
import functools

import jax
import jax.numpy as jnp
from jax.experimental import pallas as pl
from jax.experimental.pallas import tpu as pltpu

LOG_STD_MAX = 2.0
LOG_STD_MIN = -20.0
LN_EPS = 1e-5

LANE = 128
SUB = 8

# Rows of the packed small-parameter array (shared by pack_params and the kernel).
(P_B1, P_G1, P_BE1, P_B2, P_G2, P_BE2,
 P_HEAD_BIAS, P_SCALE, P_LOC, P_MASK) = range(10)
_N_PARAM_ROWS = 10


def _round_up(x, m):
    return ((x + m - 1) // m) * m


# -----------------------------------------------------------------------------
# Kernel
# -----------------------------------------------------------------------------
def actor_critic_kernel(
    x_ref,       # [TB, obs_dim]      f32  (lane-unpadded observations)
    noise_ref,   # [TB, 2*action_dim] f32  (lanes [0,a)=0, lanes [a,2a)=eps)
    w1_ref,      # [obs_dim, HID_P]   matmul_dtype (resident)
    w2_ref,      # [HID_P, HID_P]     matmul_dtype (resident)
    wh_ref,      # [HID_P, HEAD_B]    matmul_dtype (resident) = [wa | wv | 0]
    p_ref,       # [16, HID_P]        f32 packed small params (rows P_*)
    out_ref,     # [TB, 2*HEAD_B]     f32: [:HEAD_B]=logits|value, [HEAD_B:HEAD_B+2a]=action parts
    *,
    hidden_dim,
    action_dim,
):
    head_b = wh_ref.shape[1]
    two_a = 2 * action_dim
    inv_n = 1.0 / float(hidden_dim)

    # 1.0 on real hidden lanes, 0.0 on padded lanes (packed host-side).
    lnmask = p_ref[P_MASK:P_MASK + 1, :]

    def linear_ln_relu(h_in, w_ref, b, g, beta):
        # MXU matmul (bf16/f32 operands, f32 accumulation). Padded output lanes
        # are exactly 0 (padded weight columns / biases are 0).
        h = jnp.dot(h_in.astype(w_ref.dtype), w_ref[...],
                    preferred_element_type=jnp.float32) + b
        # Two-pass LayerNorm: center first, mask padded lanes out of the variance,
        # so statistics cover exactly `hidden_dim` lanes with no E[x^2]-E[x]^2
        # cancellation.
        mean = jnp.sum(h, axis=-1, keepdims=True) * inv_n
        c = (h - mean) * lnmask
        var = jnp.sum(c * c, axis=-1, keepdims=True) * inv_n
        # gamma/beta padded lanes are 0 -> padded lanes stay 0 through the ReLU.
        return jnp.maximum(c * jax.lax.rsqrt(var + LN_EPS) * g + beta, 0.0)

    h = linear_ln_relu(x_ref[...], w1_ref,
                       p_ref[P_B1:P_B1 + 1, :],
                       p_ref[P_G1:P_G1 + 1, :],
                       p_ref[P_BE1:P_BE1 + 1, :])
    h = linear_ln_relu(h, w2_ref,
                       p_ref[P_B2:P_B2 + 1, :],
                       p_ref[P_G2:P_G2 + 1, :],
                       p_ref[P_BE2:P_BE2 + 1, :])

    # Fused action + value head: a single [HID_P, 128] matmul -> [mu | log_std | value | 0].
    head = jnp.dot(h.astype(wh_ref.dtype), wh_ref[...],
                   preferred_element_type=jnp.float32)
    head = head + p_ref[P_HEAD_BIAS:P_HEAD_BIAS + 1, :head_b]
    out_ref[:, :head_b] = head                              # lane-dense head store

    # Reparameterized Normal sample on the 2*action_dim logits lanes only.
    #   lanes [0, a):  tanh(mu)*scale + loc            (scale/loc are 0 on [a, 2a))
    #   lanes [a, 2a): exp(clip(log_std)) * eps        (noise is 0 on [0, a))
    # The wrapper adds the two lane groups, so no cross-lane shuffle is needed
    # in-kernel.  (Equivalent alternative: pltpu.roll(head, head_b - action_dim).)
    logits = head[:, :two_a]
    mean_part = (jnp.tanh(logits) * p_ref[P_SCALE:P_SCALE + 1, :two_a]
                 + p_ref[P_LOC:P_LOC + 1, :two_a])
    sigma = jnp.exp(jnp.clip(logits, LOG_STD_MIN, LOG_STD_MAX))
    out_ref[:, head_b:head_b + two_a] = mean_part + sigma * noise_ref[...]


# -----------------------------------------------------------------------------
# Host-side parameter packing
# -----------------------------------------------------------------------------
def pack_params(params, obs_dim, hidden_dim, action_dim,
                matmul_dtype=jnp.bfloat16, hidden_align=LANE):
    # hidden_align=256 can help MXU occupancy on v6e/v7x when hidden_dim > 128;
    # keep 128 on v5e (128x128 MXU) and for small hidden dims.
    hid_p = max(_round_up(hidden_dim, hidden_align), LANE)
    head_b = LANE
    assert 2 * action_dim + 1 <= head_b, \
        "action_dim too large for a single 128-lane head block"
    pw = hid_p  # >= head_b

    w1 = jnp.zeros((obs_dim, hid_p), jnp.float32)
    w1 = w1.at[:, :hidden_dim].set(params["w1"]).astype(matmul_dtype)
    w2 = jnp.zeros((hid_p, hid_p), jnp.float32)
    w2 = w2.at[:hidden_dim, :hidden_dim].set(params["w2"]).astype(matmul_dtype)

    w_head = jnp.zeros((hid_p, head_b), jnp.float32)
    w_head = w_head.at[:hidden_dim, :2 * action_dim].set(params["wa"])
    w_head = w_head.at[:hidden_dim, 2 * action_dim:2 * action_dim + 1].set(params["wv"])
    w_head = w_head.astype(matmul_dtype)

    rows = [None] * _N_PARAM_ROWS
    rows[P_B1] = params["b1"].reshape(-1)
    rows[P_G1] = params["g1"].reshape(-1)
    rows[P_BE1] = params["be1"].reshape(-1)
    rows[P_B2] = params["b2"].reshape(-1)
    rows[P_G2] = params["g2"].reshape(-1)
    rows[P_BE2] = params["be2"].reshape(-1)
    rows[P_HEAD_BIAS] = jnp.concatenate(
        [params["ba"].reshape(-1), params["bv"].reshape(-1)])
    rows[P_SCALE] = params["action_scale"].reshape(-1)
    rows[P_LOC] = params["action_loc"].reshape(-1)
    rows[P_MASK] = jnp.ones((hidden_dim,), jnp.float32)     # LayerNorm lane mask

    packed = jnp.zeros((_round_up(_N_PARAM_ROWS, SUB), pw), jnp.float32)
    for i, v in enumerate(rows):
        packed = packed.at[i, :v.shape[0]].set(v)

    return w1, w2, w_head, packed, hid_p, head_b


def _choose_tile(batch, tile_batch):
    tb = min(_round_up(tile_batch, SUB), _round_up(batch, SUB))
    b_pad = _round_up(batch, tb)
    # v7x megacore: prefer >= 2 grid programs so the "parallel" batch axis can be
    # sharded across both TensorCores (v5e/v6e single-TC are unaffected).
    if b_pad // tb < 2 and batch > SUB:
        tb = _round_up((batch + 1) // 2, SUB)
        b_pad = _round_up(batch, tb)
    return tb, b_pad


# -----------------------------------------------------------------------------
# Wrapper
# -----------------------------------------------------------------------------
def actor_critic_forward(state, params, noise, *, tile_batch=512,
                         matmul_dtype=jnp.bfloat16, hidden_align=LANE):
    B, obs_dim = state.shape
    action_dim = noise.shape[-1]
    hidden_dim = params["w1"].shape[1]
    two_a = 2 * action_dim

    w1, w2, w_head, packed, hid_p, head_b = pack_params(
        params, obs_dim, hidden_dim, action_dim, matmul_dtype, hidden_align)

    tb, b_pad = _choose_tile(B, tile_batch)

    # Observations are streamed lane-unpadded; batch is padded only when needed.
    state_in = state.astype(jnp.float32)
    if b_pad != B:
        state_in = jnp.pad(state_in, ((0, b_pad - B), (0, 0)))
    # Noise: tiny [B, 2a] stream with eps pre-shifted to lanes [a, 2a).
    noise_in = jnp.pad(noise.astype(jnp.float32),
                       ((0, b_pad - B), (action_dim, 0)))

    grid = (b_pad // tb,)
    in_specs = [
        pl.BlockSpec((tb, obs_dim), lambda i: (i, 0)),      # state  (streamed)
        pl.BlockSpec((tb, two_a), lambda i: (i, 0)),        # noise  (streamed)
        # Resident weights (constant index_map -> fetched once, stay in VMEM).
        # NOTE: for very large hidden_dim on v7x (64 MiB VMEM), also consider
        # pipeline_mode=pl.Buffered(1) on these specs to drop the second buffer.
        pl.BlockSpec(w1.shape, lambda i: (0, 0)),
        pl.BlockSpec(w2.shape, lambda i: (0, 0)),
        pl.BlockSpec(w_head.shape, lambda i: (0, 0)),
        pl.BlockSpec(packed.shape, lambda i: (0, 0)),
    ]
    out_specs = pl.BlockSpec((tb, 2 * head_b), lambda i: (i, 0))
    out_shape = jax.ShapeDtypeStruct((b_pad, 2 * head_b), jnp.float32)

    wbytes = sum(int(a.size) * a.dtype.itemsize for a in (w1, w2, w_head, packed))
    stream_bytes = b_pad * (obs_dim + two_a + 2 * head_b) * 4
    cost = pl.CostEstimate(
        flops=2 * b_pad * (obs_dim * hid_p + hid_p * hid_p + hid_p * head_b),
        transcendentals=b_pad * (4 * action_dim + 2),
        bytes_accessed=stream_bytes + wbytes,
    )

    # VMEM budget: double-buffered streamed tiles + resident weights + live f32
    # activations, with margin.  Clamped to [32 MiB, 64 MiB] so it is legal on
    # every generation (v5e default scoped is only 16 MiB; v7x physical is 64 MiB).
    need = (2 * wbytes
            + 4 * tb * (obs_dim + two_a + 2 * head_b) * 4
            + 6 * tb * hid_p * 4)
    vmem_limit = int(min(max(2 * need, 32 * 1024 * 1024), 64 * 1024 * 1024))

    out = pl.pallas_call(
        functools.partial(actor_critic_kernel,
                          hidden_dim=hidden_dim, action_dim=action_dim),
        grid=grid,
        in_specs=in_specs,
        out_specs=out_specs,
        out_shape=out_shape,
        compiler_params=pltpu.CompilerParams(
            dimension_semantics=("parallel",),   # megacore-shard batch tiles on v7x
            vmem_limit_bytes=vmem_limit,
        ),
        cost_estimate=cost,
    )(state_in, noise_in, w1, w2, w_head, packed)

    logits = out[:B, :two_a]
    value = out[:B, two_a]
    action = (out[:B, head_b:head_b + action_dim]
              + out[:B, head_b + action_dim:head_b + two_a])
    return action, logits, value


# -----------------------------------------------------------------------------
# Params + pure-JAX reference (for correctness check)
# -----------------------------------------------------------------------------
def init_params(key, obs_dim, hidden_dim, action_dim):
    ks = jax.random.split(key, 4)
    p = {}
    # weights stored as [in_features, out_features] (transposed vs nn.Linear.weight)
    p["w1"] = jax.random.normal(ks[0], (obs_dim, hidden_dim), jnp.float32) * 0.1
    p["b1"] = jnp.zeros((1, hidden_dim), jnp.float32)
    p["g1"] = jnp.ones((1, hidden_dim), jnp.float32)
    p["be1"] = jnp.zeros((1, hidden_dim), jnp.float32)
    p["w2"] = jax.random.normal(ks[1], (hidden_dim, hidden_dim), jnp.float32) * 0.1
    p["b2"] = jnp.zeros((1, hidden_dim), jnp.float32)
    p["g2"] = jnp.ones((1, hidden_dim), jnp.float32)
    p["be2"] = jnp.zeros((1, hidden_dim), jnp.float32)
    p["wa"] = jax.random.normal(ks[2], (hidden_dim, 2 * action_dim), jnp.float32) * 0.1
    p["ba"] = jnp.zeros((1, 2 * action_dim), jnp.float32)
    p["wv"] = jax.random.normal(ks[3], (hidden_dim, 1), jnp.float32) * 0.1
    p["bv"] = jnp.zeros((1, 1), jnp.float32)
    p["action_scale"] = jnp.full((1, action_dim), 2.0, jnp.float32)
    p["action_loc"] = jnp.zeros((1, action_dim), jnp.float32)
    return p


def _reference_layernorm(h, gamma, beta):
    mean = jnp.mean(h, axis=-1, keepdims=True)
    var = jnp.mean((h - mean) ** 2, axis=-1, keepdims=True)
    return (h - mean) * jax.lax.rsqrt(var + LN_EPS) * gamma + beta


def reference_forward(state, params, noise):
    a = noise.shape[-1]
    h = state @ params["w1"] + params["b1"]
    h = jnp.maximum(_reference_layernorm(h, params["g1"], params["be1"]), 0.0)
    h = h @ params["w2"] + params["b2"]
    h = jnp.maximum(_reference_layernorm(h, params["g2"], params["be2"]), 0.0)
    logits = h @ params["wa"] + params["ba"]
    value = (h @ params["wv"] + params["bv"])[:, 0]
    mu, log_std = logits[:, :a], logits[:, a:]
    log_std = jnp.clip(log_std, LOG_STD_MIN, LOG_STD_MAX)
    mu = jnp.tanh(mu) * params["action_scale"] + params["action_loc"]
    action = mu + jnp.exp(log_std) * noise
    return action, logits, value


if __name__ == "__main__":
    batch = 64
    obs_dim = 16
    hidden_dim = 32
    action_dim = 4

    key = jax.random.PRNGKey(0)
    k_params, k_obs, k_noise = jax.random.split(key, 3)

    params = init_params(k_params, obs_dim, hidden_dim, action_dim)
    state = jax.random.normal(k_obs, (batch, obs_dim), jnp.float32)
    # standard-normal noise for the reparameterized Normal(mu, exp(log_std)).sample()
    noise = jax.random.normal(k_noise, (batch, action_dim), jnp.float32)

    ref_action, ref_logits, ref_value = reference_forward(state, params, noise)

    # f32 MXU operands: matches the PyTorch/JAX reference tightly.
    action, logits, value = jax.block_until_ready(
        actor_critic_forward(state, params, noise, matmul_dtype=jnp.float32))
    assert action.shape == (batch, action_dim)
    assert logits.shape == (batch, 2 * action_dim)
    assert value.shape == (batch,)
    assert jnp.allclose(logits, ref_logits, atol=1e-3, rtol=1e-3)
    assert jnp.allclose(value, ref_value, atol=1e-3, rtol=1e-3)
    assert jnp.allclose(action, ref_action, atol=1e-3, rtol=1e-3)

    # Default bf16 MXU operands (f32 accumulation): the fast path on v5e/v6e/v7x.
    # Looser tolerance accounts for bf16 operand rounding.
    action_bf, logits_bf, value_bf = jax.block_until_ready(
        actor_critic_forward(state, params, noise))
    assert jnp.allclose(logits_bf, ref_logits, atol=1e-1, rtol=1e-1)
    assert jnp.allclose(value_bf, ref_value, atol=1e-1, rtol=1e-1)
    assert jnp.allclose(action_bf, ref_action, atol=1e-1, rtol=1e-1)

    print("KERNEL_OK")
</pallas_src>

<mosaic_0001>
module attributes {stable_mosaic.version = 11 : i64} {
  func.func @actor_critic_kernel(%arg0: i32, %arg1: memref<32x16xf32, #tpu.memory_space<vmem>>, %arg2: memref<32x8xf32, #tpu.memory_space<vmem>>, %arg3: memref<16x128xf32, #tpu.memory_space<vmem>>, %arg4: memref<128x128xf32, #tpu.memory_space<vmem>>, %arg5: memref<128x128xf32, #tpu.memory_space<vmem>>, %arg6: memref<16x128xf32, #tpu.memory_space<vmem>>, %arg7: memref<32x256xf32, #tpu.memory_space<vmem>>) attributes {dimension_semantics = [#tpu.dimension_semantics<parallel>], iteration_bounds = array<i64: 2>, scalar_prefetch = 0 : i64, scratch_operands = 0 : i64, tpu.core_type = #tpu.core_type<tc>, window_params = [{transform_indices = @transform_0, window_bounds = array<i64: 32, 16>}, {transform_indices = @transform_1, window_bounds = array<i64: 32, 8>}, {pipeline_mode = #tpu.pipeline_mode<synchronous>, transform_indices = @transform_2, window_bounds = array<i64: 16, 128>}, {pipeline_mode = #tpu.pipeline_mode<synchronous>, transform_indices = @transform_3, window_bounds = array<i64: 128, 128>}, {pipeline_mode = #tpu.pipeline_mode<synchronous>, transform_indices = @transform_4, window_bounds = array<i64: 128, 128>}, {pipeline_mode = #tpu.pipeline_mode<synchronous>, transform_indices = @transform_5, window_bounds = array<i64: 16, 128>}, {transform_indices = @transform_6, window_bounds = array<i64: 32, 256>}]} {
    %c9 = arith.constant 9 : index
    %c0 = arith.constant 0 : index
    %0 = vector.load %arg6[%c9, %c0] : memref<16x128xf32, #tpu.memory_space<vmem>>, vector<1x128xf32>
    %c0_0 = arith.constant 0 : index
    %c0_1 = arith.constant 0 : index
    %1 = vector.load %arg1[%c0_0, %c0_1] : memref<32x16xf32, #tpu.memory_space<vmem>>, vector<32x16xf32>
    %c0_2 = arith.constant 0 : index
    %c0_3 = arith.constant 0 : index
    %2 = vector.load %arg6[%c0_2, %c0_3] : memref<16x128xf32, #tpu.memory_space<vmem>>, vector<1x128xf32>
    %c1 = arith.constant 1 : index
    %c0_4 = arith.constant 0 : index
    %3 = vector.load %arg6[%c1, %c0_4] : memref<16x128xf32, #tpu.memory_space<vmem>>, vector<1x128xf32>
    %c2 = arith.constant 2 : index
    %c0_5 = arith.constant 0 : index
    %4 = vector.load %arg6[%c2, %c0_5] : memref<16x128xf32, #tpu.memory_space<vmem>>, vector<1x128xf32>
    %c0_6 = arith.constant 0 : index
    %c0_7 = arith.constant 0 : index
    %5 = vector.load %arg3[%c0_6, %c0_7] : memref<16x128xf32, #tpu.memory_space<vmem>>, vector<16x128xf32>
    %cst = arith.constant dense<0.000000e+00> : vector<32x128xf32>
    %6 = tpu.matmul %1, %5, %cst {dimension_numbers = #tpu.dot_dimension_numbers<[1], [0], [0], [1], [0, 0, 1, 1], [], []>} : vector<32x16xf32>, vector<16x128xf32>, vector<32x128xf32> -> vector<32x128xf32>
    %7 = vector.broadcast %2 : vector<1x128xf32> to vector<32x128xf32>
    %8 = arith.addf %6, %7 : vector<32x128xf32>
    %cst_8 = arith.constant dense<0.000000e+00> : vector<32xf32>
    %9 = vector.multi_reduction <add>, %8, %cst_8 [1] : vector<32x128xf32> to vector<32xf32>
    %10 = vector.shape_cast %9 : vector<32xf32> to vector<32x1xf32>
    %cst_9 = arith.constant 3.125000e-02 : f32
    %11 = vector.broadcast %cst_9 : f32 to vector<32x1xf32>
    %12 = arith.mulf %10, %11 : vector<32x1xf32>
    %13 = vector.broadcast %12 : vector<32x1xf32> to vector<32x128xf32>
    %14 = arith.subf %8, %13 : vector<32x128xf32>
    %15 = vector.broadcast %0 : vector<1x128xf32> to vector<32x128xf32>
    %16 = arith.mulf %14, %15 : vector<32x128xf32>
    %17 = arith.mulf %16, %16 : vector<32x128xf32>
    %cst_10 = arith.constant dense<0.000000e+00> : vector<32xf32>
    %18 = vector.multi_reduction <add>, %17, %cst_10 [1] : vector<32x128xf32> to vector<32xf32>
    %19 = vector.shape_cast %18 : vector<32xf32> to vector<32x1xf32>
    %cst_11 = arith.constant 3.125000e-02 : f32
    %20 = vector.broadcast %cst_11 : f32 to vector<32x1xf32>
    %21 = arith.mulf %19, %20 : vector<32x1xf32>
    %cst_12 = arith.constant 9.99999974E-6 : f32
    %22 = vector.broadcast %cst_12 : f32 to vector<32x1xf32>
    %23 = arith.addf %21, %22 : vector<32x1xf32>
    %24 = math.rsqrt %23 : vector<32x1xf32>
    %25 = vector.broadcast %24 : vector<32x1xf32> to vector<32x128xf32>
    %26 = arith.mulf %16, %25 : vector<32x128xf32>
    %27 = vector.broadcast %3 : vector<1x128xf32> to vector<32x128xf32>
    %28 = arith.mulf %26, %27 : vector<32x128xf32>
    %29 = vector.broadcast %4 : vector<1x128xf32> to vector<32x128xf32>
    %30 = arith.addf %28, %29 : vector<32x128xf32>
    %cst_13 = arith.constant 0.000000e+00 : f32
    %31 = vector.broadcast %cst_13 : f32 to vector<32x128xf32>
    %32 = arith.maximumf %30, %31 : vector<32x128xf32>
    %c3 = arith.constant 3 : index
    %c0_14 = arith.constant 0 : index
    %33 = vector.load %arg6[%c3, %c0_14] : memref<16x128xf32, #tpu.memory_space<vmem>>, vector<1x128xf32>
    %c4 = arith.constant 4 : index
    %c0_15 = arith.constant 0 : index
    %34 = vector.load %arg6[%c4, %c0_15] : memref<16x128xf32, #tpu.memory_space<vmem>>, vector<1x128xf32>
    %c5 = arith.constant 5 : index
    %c0_16 = arith.constant 0 : index
    %35 = vector.load %arg6[%c5, %c0_16] : memref<16x128xf32, #tpu.memory_space<vmem>>, vector<1x128xf32>
    %c0_17 = arith.constant 0 : index
    %c0_18 = arith.constant 0 : index
    %36 = vector.load %arg4[%c0_17, %c0_18] : memref<128x128xf32, #tpu.memory_space<vmem>>, vector<128x128xf32>
    %cst_19 = arith.constant dense<0.000000e+00> : vector<32x128xf32>
    %37 = tpu.matmul %32, %36, %cst_19 {dimension_numbers = #tpu.dot_dimension_numbers<[1], [0], [0], [1], [0, 0, 1, 1], [], []>} : vector<32x128xf32>, vector<128x128xf32>, vector<32x128xf32> -> vector<32x128xf32>
    %38 = vector.broadcast %33 : vector<1x128xf32> to vector<32x128xf32>
    %39 = arith.addf %37, %38 : vector<32x128xf32>
    %cst_20 = arith.constant dense<0.000000e+00> : vector<32xf32>
    %40 = vector.multi_reduction <add>, %39, %cst_20 [1] : vector<32x128xf32> to vector<32xf32>
    %41 = vector.shape_cast %40 : vector<32xf32> to vector<32x1xf32>
    %cst_21 = arith.constant 3.125000e-02 : f32
    %42 = vector.broadcast %cst_21 : f32 to vector<32x1xf32>
    %43 = arith.mulf %41, %42 : vector<32x1xf32>
    %44 = vector.broadcast %43 : vector<32x1xf32> to vector<32x128xf32>
    %45 = arith.subf %39, %44 : vector<32x128xf32>
    %46 = vector.broadcast %0 : vector<1x128xf32> to vector<32x128xf32>
    %47 = arith.mulf %45, %46 : vector<32x128xf32>
    %48 = arith.mulf %47, %47 : vector<32x128xf32>
    %cst_22 = arith.constant dense<0.000000e+00> : vector<32xf32>
    %49 = vector.multi_reduction <add>, %48, %cst_22 [1] : vector<32x128xf32> to vector<32xf32>
    %50 = vector.shape_cast %49 : vector<32xf32> to vector<32x1xf32>
    %cst_23 = arith.constant 3.125000e-02 : f32
    %51 = vector.broadcast %cst_23 : f32 to vector<32x1xf32>
    %52 = arith.mulf %50, %51 : vector<32x1xf32>
    %cst_24 = arith.constant 9.99999974E-6 : f32
    %53 = vector.broadcast %cst_24 : f32 to vector<32x1xf32>
    %54 = arith.addf %52, %53 : vector<32x1xf32>
    %55 = math.rsqrt %54 : vector<32x1xf32>
    %56 = vector.broadcast %55 : vector<32x1xf32> to vector<32x128xf32>
    %57 = arith.mulf %47, %56 : vector<32x128xf32>
    %58 = vector.broadcast %34 : vector<1x128xf32> to vector<32x128xf32>
    %59 = arith.mulf %57, %58 : vector<32x128xf32>
    %60 = vector.broadcast %35 : vector<1x128xf32> to vector<32x128xf32>
    %61 = arith.addf %59, %60 : vector<32x128xf32>
    %cst_25 = arith.constant 0.000000e+00 : f32
    %62 = vector.broadcast %cst_25 : f32 to vector<32x128xf32>
    %63 = arith.maximumf %61, %62 : vector<32x128xf32>
    %c0_26 = arith.constant 0 : index
    %c0_27 = arith.constant 0 : index
    %64 = vector.load %arg5[%c0_26, %c0_27] : memref<128x128xf32, #tpu.memory_space<vmem>>, vector<128x128xf32>
    %cst_28 = arith.constant dense<0.000000e+00> : vector<32x128xf32>
    %65 = tpu.matmul %63, %64, %cst_28 {dimension_numbers = #tpu.dot_dimension_numbers<[1], [0], [0], [1], [0, 0, 1, 1], [], []>} : vector<32x128xf32>, vector<128x128xf32>, vector<32x128xf32> -> vector<32x128xf32>
    %c6 = arith.constant 6 : index
    %c0_29 = arith.constant 0 : index
    %66 = vector.load %arg6[%c6, %c0_29] : memref<16x128xf32, #tpu.memory_space<vmem>>, vector<1x128xf32>
    %67 = vector.broadcast %66 : vector<1x128xf32> to vector<32x128xf32>
    %68 = arith.addf %65, %67 : vector<32x128xf32>
    %c0_30 = arith.constant 0 : index
    %c0_31 = arith.constant 0 : index
    %69 = vector.load %arg7[%c0_30, %c0_31] : memref<32x256xf32, #tpu.memory_space<vmem>>, vector<32x128xf32>
    tpu.vector_store %arg7[%c0_30, %c0_31], %68 {strides = array<i32>} : memref<32x256xf32, #tpu.memory_space<vmem>>, vector<32x128xf32>,
    %70 = vector.extract_strided_slice %68 {offsets = [0, 0], sizes = [32, 8], strides = [1, 1]} : vector<32x128xf32> to vector<32x8xf32>
    %71 = math.tanh %70 : vector<32x8xf32>
    %c7 = arith.constant 7 : index
    %c0_32 = arith.constant 0 : index
    %72 = vector.load %arg6[%c7, %c0_32] : memref<16x128xf32, #tpu.memory_space<vmem>>, vector<1x8xf32>
    %73 = vector.broadcast %72 : vector<1x8xf32> to vector<32x8xf32>
    %74 = arith.mulf %71, %73 : vector<32x8xf32>
    %c8 = arith.constant 8 : index
    %c0_33 = arith.constant 0 : index
    %75 = vector.load %arg6[%c8, %c0_33] : memref<16x128xf32, #tpu.memory_space<vmem>>, vector<1x8xf32>
    %76 = vector.broadcast %75 : vector<1x8xf32> to vector<32x8xf32>
    %77 = arith.addf %74, %76 : vector<32x8xf32>
    %cst_34 = arith.constant -2.000000e+01 : f32
    %cst_35 = arith.constant 2.000000e+00 : f32
    %78 = vector.broadcast %cst_34 : f32 to vector<32x8xf32>
    %79 = arith.maximumf %78, %70 : vector<32x8xf32>
    %80 = vector.broadcast %cst_35 : f32 to vector<32x8xf32>
    %81 = arith.minimumf %80, %79 : vector<32x8xf32>
    %82 = math.exp %81 : vector<32x8xf32>
    %c0_36 = arith.constant 0 : index
    %c0_37 = arith.constant 0 : index
    %83 = vector.load %arg2[%c0_36, %c0_37] : memref<32x8xf32, #tpu.memory_space<vmem>>, vector<32x8xf32>
    %84 = arith.mulf %82, %83 : vector<32x8xf32>
    %85 = arith.addf %77, %84 : vector<32x8xf32>
    %c0_38 = arith.constant 0 : index
    %c128 = arith.constant 128 : index
    %86 = vector.load %arg7[%c0_38, %c128] : memref<32x256xf32, #tpu.memory_space<vmem>>, vector<32x8xf32>
    tpu.vector_store %arg7[%c0_38, %c128], %85 {strides = array<i32>} : memref<32x256xf32, #tpu.memory_space<vmem>>, vector<32x8xf32>,
    return
  }
  func.func @transform_0(%arg0: i32) -> (i32, i32) {
    %c0_i32 = arith.constant 0 : i32
    %c0_i32_0 = arith.constant 0 : i32
    return %arg0, %c0_i32 : i32, i32
  }
  func.func @transform_1(%arg0: i32) -> (i32, i32) {
    %c0_i32 = arith.constant 0 : i32
    %c0_i32_0 = arith.constant 0 : i32
    return %arg0, %c0_i32 : i32, i32
  }
  func.func @transform_2(%arg0: i32) -> (i32, i32) {
    %c0_i32 = arith.constant 0 : i32
    %c0_i32_0 = arith.constant 0 : i32
    %c0_i32_1 = arith.constant 0 : i32
    return %c0_i32, %c0_i32_0 : i32, i32
  }
  func.func @transform_3(%arg0: i32) -> (i32, i32) {
    %c0_i32 = arith.constant 0 : i32
    %c0_i32_0 = arith.constant 0 : i32
    %c0_i32_1 = arith.constant 0 : i32
    return %c0_i32, %c0_i32_0 : i32, i32
  }
  func.func @transform_4(%arg0: i32) -> (i32, i32) {
    %c0_i32 = arith.constant 0 : i32
    %c0_i32_0 = arith.constant 0 : i32
    %c0_i32_1 = arith.constant 0 : i32
    return %c0_i32, %c0_i32_0 : i32, i32
  }
  func.func @transform_5(%arg0: i32) -> (i32, i32) {
    %c0_i32 = arith.constant 0 : i32
    %c0_i32_0 = arith.constant 0 : i32
    %c0_i32_1 = arith.constant 0 : i32
    return %c0_i32, %c0_i32_0 : i32, i32
  }
  func.func @transform_6(%arg0: i32) -> (i32, i32) {
    %c0_i32 = arith.constant 0 : i32
    %c0_i32_0 = arith.constant 0 : i32
    return %arg0, %c0_i32 : i32, i32
  }
}

</mosaic_0001>

<llo_original>
// kernel: tpu_custom_call.1
$region0: #{tpu_custom_call.1}
  #allocation0 [shape = 'u32[]', space=smem, size = 0x4, offset = 0x4, fixed_abs, tag = 'smem constant byte address 0x4 - core index']
  #allocation1 [shape = 'u32[144,128]{1,0:T(1,128)}', space=vmem, size = 0x12000, scoped, tag = 'internal scratch']
  %s0 = inlined_call_operand.vmem [shape: f32[64,16], index: 0, kind: input, shape index: {}]
  %s1 = inlined_call_operand.vmem [shape: f32[64,8], index: 1, kind: input, shape index: {}]
  %s2 = inlined_call_operand.vmem [shape: f32[16,128], index: 2, kind: input, shape index: {}]
  %s3 = inlined_call_operand.vmem [shape: f32[128,128], index: 3, kind: input, shape index: {}]
  %s4 = inlined_call_operand.hbm [shape: f32[128,128], index: 4, kind: input, shape index: {}]
  %s5 = inlined_call_operand.vmem [shape: f32[16,128], index: 5, kind: input, shape index: {}]
  %s6 = inlined_call_operand.hbm [shape: f32[64,256], index: 6, kind: output, shape index: {}]
  %s7 = sld [smem:[#allocation0]]
  $region61: #{tpu_custom_call.1} parent=0
    _
  %s9 = ssub.s32 1, %s7
  %s10 = scalar_select 0, %s9, %s7
  $region1: #{tpu_custom_call.1} parent=0
    #allocation2 [shape = 'u8[65536]{0}', space=vmem, size = 0x10000, scoped, tag = 'input window, operand 4, single buffered']
    #allocation3 [shape = 's32[2]{0}', space=sflag, size = 0x8, scoped, tag = 'scoped memory for tpu_custom_call.1']
    #allocation4 [shape = 's32[2]{0}', space=sflag, size = 0x8, scoped, tag = 'scoped memory for tpu_custom_call.1']
    #allocation5 [shape = 'u8[65536]{0}', space=vmem, size = 0x10000, scoped, tag = 'output window, operand 0']
    %11 = vsyncpa [#allocation3], 0
    %12 = vsyncpa [#allocation4], 0
    %s13 = scalar_lea.sflag [#allocation4], 1
    %14 = vsyncpa %s13, 0
    loop: start=0, step=1, limit=4
    $region2: #{tpu_custom_call.1} parent=1 // loop_pre_header
      _
    $region3: #{tpu_custom_call.1} parent=1 // loop_header
      %s16 = sphi 0, %s20
      %p17 = scmp.ge.s32.totalorder %s16, 4
      %s26 = sphi 0, %s28
      %s29 = sphi 0, %s26
      %s30 = sphi 0, %s29
      %s46 = sphi 0, %s30
      %s52 = sphi 0, %s54
      %s55 = sphi 0, %s52
      %s56 = sphi 0, %s55
      %s72 = sphi 0, %s56
      %s76 = sphi 0, %s76
      %s78 = sphi 0, %s76
      %s79 = sphi 0, %s78
      %s93 = sphi 0, %s79
      %s97 = sphi 0, %s97
      %s99 = sphi 0, %s97
      %s100 = sphi 0, %s99
      %s114 = sphi 0, %s100
      %s118 = sphi 0, %s118
      %s120 = sphi 0, %s118
      %s121 = sphi 0, %s120
      %s135 = sphi 0, %s121
      %s139 = sphi 0, %s139
      %s141 = sphi 0, %s139
      %s142 = sphi 0, %s141
      %s156 = sphi 0, %s142
      %s162 = sphi 0, %s164
      %s165 = sphi 0, %s162
      %s166 = sphi 0, %s165
      %s182 = sphi 0, %s166
    $region4: #{tpu_custom_call.1} parent=1 // loop_header_branch
      %19 = sbr.rel (%p17) target = $region8
    $region5: #{tpu_custom_call.1} parent=1 // loop_body
      %s21 = ssub.s32 %s16, 1
      %s22 = ssub.s32 %s16, 2
      %s23 = sadd.s32 %s16, 1
      %s24 = ssub.s32 %s16, %s23
      %p25 = scmp.eq.s32.totalorder %s24, 0
      %s27 = sadd.s32 %s26, 1
      %s28 = scalar_select %p25, %s26, %s27
      %p31 = pneg %p25
      %p32 = scmp.eq.s32.totalorder %s16, 1
      %p33 = por %p31, %p32
      %p34 = scmp.ne.s32.totalorder %s26, %s29
      %p35 = scmp.eq.s32.totalorder %s16, 0
      %p36 = por %p34, %p35
      %p37 = scmp.ne.s32.totalorder %s26, %s29
      %p38 = scmp.eq.s32.totalorder %s21, 1
      %p39 = por %p37, %p38
      %p40 = scmp.ne.s32.totalorder %s29, %s30
      %p41 = scmp.eq.s32.totalorder %s21, 0
      %p42 = por %p40, %p41
      %p43 = scmp.ne.s32.totalorder %s29, %s30
      %p44 = scmp.eq.s32.totalorder %s22, 1
      %p45 = por %p43, %p44
      %p47 = scmp.ne.s32.totalorder %s30, %s46
      %p48 = scmp.eq.s32.totalorder %s22, 0
      %p49 = por %p47, %p48
      %s50 = ssub.s32 %s16, %s23
      %p51 = scmp.eq.s32.totalorder %s50, 0
      %s53 = sadd.s32 %s52, 1
      %s54 = scalar_select %p51, %s52, %s53
      %p57 = pneg %p51
      %p58 = scmp.eq.s32.totalorder %s16, 1
      %p59 = por %p57, %p58
      %p60 = scmp.ne.s32.totalorder %s52, %s55
      %p61 = scmp.eq.s32.totalorder %s16, 0
      %p62 = por %p60, %p61
      %p63 = scmp.ne.s32.totalorder %s52, %s55
      %p64 = scmp.eq.s32.totalorder %s21, 1
      %p65 = por %p63, %p64
      %p66 = scmp.ne.s32.totalorder %s55, %s56
      %p67 = scmp.eq.s32.totalorder %s21, 0
      %p68 = por %p66, %p67
      %p69 = scmp.ne.s32.totalorder %s55, %s56
      %p70 = scmp.eq.s32.totalorder %s22, 1
      %p71 = por %p69, %p70
      %p73 = scmp.ne.s32.totalorder %s56, %s72
      %p74 = scmp.eq.s32.totalorder %s22, 0
      %p75 = por %p73, %p74
      %s77 = sadd.s32 %s76, 1
      %p80 = scmp.eq.s32.totalorder %s16, 1
      %p81 = scmp.ne.s32.totalorder %s76, %s78
      %p82 = scmp.eq.s32.totalorder %s16, 0
      %p83 = por %p81, %p82
      %p84 = scmp.ne.s32.totalorder %s76, %s78
      %p85 = scmp.eq.s32.totalorder %s21, 1
      %p86 = por %p84, %p85
      %p87 = scmp.ne.s32.totalorder %s78, %s79
      %p88 = scmp.eq.s32.totalorder %s21, 0
      %p89 = por %p87, %p88
      %p90 = scmp.ne.s32.totalorder %s78, %s79
      %p91 = scmp.eq.s32.totalorder %s22, 1
      %p92 = por %p90, %p91
      %p94 = scmp.ne.s32.totalorder %s79, %s93
      %p95 = scmp.eq.s32.totalorder %s22, 0
      %p96 = por %p94, %p95
      %s98 = sadd.s32 %s97, 1
      %p101 = scmp.eq.s32.totalorder %s16, 1
      %p102 = scmp.ne.s32.totalorder %s97, %s99
      %p103 = scmp.eq.s32.totalorder %s16, 0
      %p104 = por %p102, %p103
      %p105 = scmp.ne.s32.totalorder %s97, %s99
      %p106 = scmp.eq.s32.totalorder %s21, 1
      %p107 = por %p105, %p106
      %p108 = scmp.ne.s32.totalorder %s99, %s100
      %p109 = scmp.eq.s32.totalorder %s21, 0
      %p110 = por %p108, %p109
      %p111 = scmp.ne.s32.totalorder %s99, %s100
      %p112 = scmp.eq.s32.totalorder %s22, 1
      %p113 = por %p111, %p112
      %p115 = scmp.ne.s32.totalorder %s100, %s114
      %p116 = scmp.eq.s32.totalorder %s22, 0
      %p117 = por %p115, %p116
      %s119 = sadd.s32 %s118, 1
      %p122 = scmp.eq.s32.totalorder %s16, 1
      %p123 = scmp.ne.s32.totalorder %s118, %s120
      %p124 = scmp.eq.s32.totalorder %s16, 0
      %p125 = por %p123, %p124
      %p126 = scmp.ne.s32.totalorder %s118, %s120
      %p127 = scmp.eq.s32.totalorder %s21, 1
      %p128 = por %p126, %p127
      %p129 = scmp.ne.s32.totalorder %s120, %s121
      %p130 = scmp.eq.s32.totalorder %s21, 0
      %p131 = por %p129, %p130
      %p132 = scmp.ne.s32.totalorder %s120, %s121
      %p133 = scmp.eq.s32.totalorder %s22, 1
      %p134 = por %p132, %p133
      %p136 = scmp.ne.s32.totalorder %s121, %s135
      %p137 = scmp.eq.s32.totalorder %s22, 0
      %p138 = por %p136, %p137
      %s140 = sadd.s32 %s139, 1
      %p143 = scmp.eq.s32.totalorder %s16, 1
      %p144 = scmp.ne.s32.totalorder %s139, %s141
      %p145 = scmp.eq.s32.totalorder %s16, 0
      %p146 = por %p144, %p145
      %p147 = scmp.ne.s32.totalorder %s139, %s141
      %p148 = scmp.eq.s32.totalorder %s21, 1
      %p149 = por %p147, %p148
      %p150 = scmp.ne.s32.totalorder %s141, %s142
      %p151 = scmp.eq.s32.totalorder %s21, 0
      %p152 = por %p150, %p151
      %p153 = scmp.ne.s32.totalorder %s141, %s142
      %p154 = scmp.eq.s32.totalorder %s22, 1
      %p155 = por %p153, %p154
      %p157 = scmp.ne.s32.totalorder %s142, %s156
      %p158 = scmp.eq.s32.totalorder %s22, 0
      %p159 = por %p157, %p158
      %s160 = ssub.s32 %s16, %s23
      %p161 = scmp.eq.s32.totalorder %s160, 0
      %s163 = sadd.s32 %s162, 1
      %s164 = scalar_select %p161, %s162, %s163
      %p167 = pneg %p161
      %p168 = scmp.eq.s32.totalorder %s16, 1
      %p169 = por %p167, %p168
      %p170 = scmp.ne.s32.totalorder %s162, %s165
      %p171 = scmp.eq.s32.totalorder %s16, 0
      %p172 = por %p170, %p171
      %p173 = scmp.ne.s32.totalorder %s162, %s165
      %p174 = scmp.eq.s32.totalorder %s21, 1
      %p175 = por %p173, %p174
      %p176 = scmp.ne.s32.totalorder %s165, %s166
      %p177 = scmp.eq.s32.totalorder %s21, 0
      %p178 = por %p176, %p177
      %p179 = scmp.ne.s32.totalorder %s165, %s166
      %p180 = scmp.eq.s32.totalorder %s22, 1
      %p181 = por %p179, %p180
      %p183 = scmp.ne.s32.totalorder %s166, %s182
      %p184 = scmp.eq.s32.totalorder %s22, 0
      %p185 = por %p183, %p184
      %p186 = scmp.le.s32.totalorder 1, %s16
      %p187 = scmp.lt.s32.totalorder %s16, 3
      %p188 = pnand %p186, %p187
      %p189 = pneg %p188
      // Predicated region
      $region9: #{tpu_custom_call.1} parent=5 // pred_check
        _
      $region10: #{tpu_custom_call.1} parent=5 // pred_check_branch
        %191 = sbr.rel (%p188) target = $region12
      $region11: #{tpu_custom_call.1} parent=5 // pred_region
        %s192 = ssub.s32 %s16, 1
        // Predicated region
        $region13: #{tpu_custom_call.1} parent=11 // pred_check
          %p193 = pneg %p89
        $region14: #{tpu_custom_call.1} parent=11 // pred_check_branch
          %195 = sbr.rel (%p193) target = $region16
        $region15: #{tpu_custom_call.1} parent=11 // pred_region
          _
        $region16: #{tpu_custom_call.1} parent=11 // pred_fallthru
          _
        // Predicated region
        $region17: #{tpu_custom_call.1} parent=11 // pred_check
          %p196 = pneg %p110
        $region18: #{tpu_custom_call.1} parent=11 // pred_check_branch
          %198 = sbr.rel (%p196) target = $region20
        $region19: #{tpu_custom_call.1} parent=11 // pred_region
          _
        $region20: #{tpu_custom_call.1} parent=11 // pred_fallthru
          _
        // Predicated region
        $region21: #{tpu_custom_call.1} parent=11 // pred_check
          %p199 = pneg %p131
        $region22: #{tpu_custom_call.1} parent=11 // pred_check_branch
          %201 = sbr.rel (%p199) target = $region24
        $region23: #{tpu_custom_call.1} parent=11 // pred_region
          %s203 = ssub.s32 2048, 2048
          %204 = vsyncadd [#allocation3], %s203
          %s205 = sshll.u32 [#allocation2], 4
          %s206 = int_to_ptr.vmem [resolvable:$true] %s205
          %211 = dma.hbm_to_vmem [thread:$0]  %s4, 2048, %s206, [#allocation3], 128, 128, 8
        $region24: #{tpu_custom_call.1} parent=11 // pred_fallthru
          _
        // Predicated region
        $region25: #{tpu_custom_call.1} parent=11 // pred_check
          %p212 = pneg %p152
        $region26: #{tpu_custom_call.1} parent=11 // pred_check_branch
          %214 = sbr.rel (%p212) target = $region28
        $region27: #{tpu_custom_call.1} parent=11 // pred_region
          _
        $region28: #{tpu_custom_call.1} parent=11 // pred_fallthru
          _
      $region12: #{tpu_custom_call.1} parent=5 // pred_fallthru
        _
      %p215 = scmp.lt.s32.totalorder %s16, 2
      // Predicated region
      $region29: #{tpu_custom_call.1} parent=5 // pred_check
        %p216 = pneg %p215
      $region30: #{tpu_custom_call.1} parent=5 // pred_check_branch
        %218 = sbr.rel (%p216) target = $region32
      $region31: #{tpu_custom_call.1} parent=5 // pred_region
        // Predicated region
        $region33: #{tpu_custom_call.1} parent=31 // pred_check
          %p219 = pneg %p36
        $region34: #{tpu_custom_call.1} parent=31 // pred_check_branch
          %221 = sbr.rel (%p219) target = $region36
        $region35: #{tpu_custom_call.1} parent=31 // pred_region
          %s222 = smul.u32 4, %s16
          %p223 = scmp.lt.s32.totalorder %s222, 7
          %s224 = scalar_select %p223, %s222, 7
          %s225 = smul.addr %s224, 8
          %s226 = scalar_lea.vmem %s0, %s225
          %s227 = smul.u32 4, %s16
        $region36: #{tpu_custom_call.1} parent=31 // pred_fallthru
          _
        // Predicated region
        $region37: #{tpu_custom_call.1} parent=31 // pred_check
          %p228 = pneg %p62
        $region38: #{tpu_custom_call.1} parent=31 // pred_check_branch
          %230 = sbr.rel (%p228) target = $region40
        $region39: #{tpu_custom_call.1} parent=31 // pred_region
          %s231 = smul.u32 4, %s16
          %p232 = scmp.lt.s32.totalorder %s231, 7
          %s233 = scalar_select %p232, %s231, 7
          %s234 = smul.addr %s233, 8
          %s235 = scalar_lea.vmem %s1, %s234
          %s236 = smul.u32 4, %s16
        $region40: #{tpu_custom_call.1} parent=31 // pred_fallthru
          _
      $region32: #{tpu_custom_call.1} parent=5 // pred_fallthru
        _
      %p237 = scmp.le.s32.totalorder 1, %s16
      %p238 = scmp.lt.s32.totalorder %s16, 3
      %p239 = pnand %p237, %p238
      %p240 = pneg %p239
      // Predicated region
      $region41: #{tpu_custom_call.1} parent=5 // pred_check
        _
      $region42: #{tpu_custom_call.1} parent=5 // pred_check_branch
        %242 = sbr.rel (%p239) target = $region44
      $region43: #{tpu_custom_call.1} parent=5 // pred_region
        %s243 = ssub.s32 %s16, 1
        // Predicated region
        $region45: #{tpu_custom_call.1} parent=43 // pred_check
          %p244 = pneg %p131
        $region46: #{tpu_custom_call.1} parent=43 // pred_check_branch
          %246 = sbr.rel (%p244) target = $region48
        $region47: #{tpu_custom_call.1} parent=43 // pred_region
          %247 = dma.done [#allocation3], 2048
        $region48: #{tpu_custom_call.1} parent=43 // pred_fallthru
          _
        %s248 = smul.u32 4, %s21
        %p249 = scmp.lt.s32.totalorder %s248, 7
        %s250 = scalar_select %p249, %s248, 7
        %s251 = smul.addr %s250, 8
        %s252 = scalar_lea.vmem %s0, %s251
        %p253 = pneg %p42
        %p254 = pneg %p39
        %s255 = smul.u32 4, %s21
        %p256 = scmp.lt.s32.totalorder %s255, 7
        %s257 = scalar_select %p256, %s255, 7
        %s258 = smul.addr %s257, 8
        %s259 = scalar_lea.vmem %s1, %s258
        %p260 = pneg %p68
        %p261 = pneg %p65
        %p262 = pneg %p89
        %p263 = pneg %p86
        %p264 = pneg %p110
        %p265 = pneg %p107
        %p266 = pneg %p131
        %p267 = pneg %p128
        %p268 = pneg %p152
        %p269 = pneg %p149
        %p270 = pneg %p178
        %p271 = pneg %p175
        %s272 = sand.u32 %s165, 1
        %s273 = scalar_lea.sflag [#allocation4], %s272
        %s274 = sand.u32 %s165, 1
        %s275 = smul.addr %s274, 64
        %s276 = scalar_lea.vmem [#allocation5], %s275
        %s277 = smul.u32 4, %s21
        %p278 = scmp.lt.s32.totalorder %s277, 7
        %s279 = scalar_select %p278, %s277, 7
        %s280 = smul.addr %s279, 8
        %s281 = scalar_lea.vmem %s0, %s280
        %s282 = smul.u32 4, %s21
        %s283 = smul.u32 4, %s21
        %p284 = scmp.lt.s32.totalorder %s283, 7
        %s285 = scalar_select %p284, %s283, 7
        %s286 = smul.addr %s285, 8
        %s287 = scalar_lea.vmem %s1, %s286
        %s288 = smul.u32 4, %s21
        %s289 = smul.u32 4, %s21
        %v290 = vld [vmem:[%s5 + $0x9] sm:$0x1]
        %v291 = vld [vmem:[%s281] sm:$0xff]
        %v292 = vld [vmem:[%s281 + $0x8] sm:$0xff]
        %v293 = vld [vmem:[%s281 + $0x10] sm:$0xff]
        %v294 = vld [vmem:[%s281 + $0x18] sm:$0xff]
        %v295 = vld [vmem:[%s5] sm:$0x1]
        %v296 = vld [vmem:[%s5 + $0x1] sm:$0x1]
        %v297 = vld [vmem:[%s5 + $0x2] sm:$0x1]
        %v298 = vld [vmem:[%s2] sm:$0xff]
        %v299 = vld [vmem:[%s2 + $0x8] sm:$0xff]
        %v300 = vlaneseq
        %v301 = vshrl.u32 %v300, 7
        %v302 = vsub.s32 0, %v301
        %v303 = vrot.slane %v295, %v302
        %vm304 = vcmask 130048
        %v306 = vsel %vm304, %v291, 0
        %v309 = vsel %vm304, %v292, 0
        %v312 = vsel %vm304, %v293, 0
        %v315 = vsel %vm304, %v294, 0
        %317 = vmatprep.subr.mxu0 0.0
        %318 = vmatpush1.msra.mxu0 0.0
        %319 = vmatprep.subr.mxu0 0.0
        %320 = vmatpush1.msra.mxu0 0.0
        %321 = vmatprep.subr.mxu0 0.0
        %322 = vmatpush1.msra.mxu0 0.0
        %323 = vmatprep.subr.mxu0 0.0
        %324 = vmatpush1.msra.mxu0 0.0
        %325 = vmatprep.subr.mxu0 0.0
        %326 = vmatpush1.msra.mxu0 0.0
        %327 = vmatprep.subr.mxu0 0.0
        %328 = vmatpush1.msra.mxu0 0.0
        %329 = vmatprep.subr.mxu0 0.0
        %330 = vmatpush1.msra.mxu0 0.0
        %331 = vmatprep.subr.mxu0 0.0
        %332 = vmatpush1.msra.mxu0 0.0
        %333 = vmatprep.subr.mxu0 0.0
        %334 = vmatpush1.msra.mxu0 0.0
        %335 = vmatprep.subr.mxu0 0.0
        %336 = vmatpush1.msra.mxu0 0.0
        %337 = vmatprep.subr.mxu0 0.0
        %338 = vmatpush1.msra.mxu0 0.0
        %339 = vmatprep.subr.mxu0 0.0
        %340 = vmatpush1.msra.mxu0 0.0
        %341 = vmatprep.subr.mxu0 0.0
        %342 = vmatpush1.msra.mxu0 0.0
        %343 = vmatprep.subr.mxu0 0.0
        %344 = vmatpush1.msra.mxu0 0.0
        %345 = vmatprep.subr.mxu0 0.0
        %346 = vmatpush1.msra.mxu0 %v299
        %347 = vmatprep.subr.mxu0 0.0
        %348 = vmatpush1.msra.mxu0 %v298
        %349 = vmatprep.subr.mxu0 0.0
        %350 = vmatpush2.msra.mxu0 0.0
        %351 = vmatprep.subr.mxu0 0.0
        %352 = vmatpush2.msra.mxu0 0.0
        %353 = vmatprep.subr.mxu0 0.0
        %354 = vmatpush2.msra.mxu0 0.0
        %355 = vmatprep.subr.mxu0 0.0
        %356 = vmatpush2.msra.mxu0 0.0
        %357 = vmatprep.subr.mxu0 0.0
        %358 = vmatpush2.msra.mxu0 0.0
        %359 = vmatprep.subr.mxu0 0.0
        %360 = vmatpush2.msra.mxu0 0.0
        %361 = vmatprep.subr.mxu0 0.0
        %362 = vmatpush2.msra.mxu0 0.0
        %363 = vmatprep.subr.mxu0 0.0
        %364 = vmatpush2.msra.mxu0 0.0
        %365 = vmatprep.subr.mxu0 0.0
        %366 = vmatpush2.msra.mxu0 0.0
        %367 = vmatprep.subr.mxu0 0.0
        %368 = vmatpush2.msra.mxu0 0.0
        %369 = vmatprep.subr.mxu0 0.0
        %370 = vmatpush2.msra.mxu0 0.0
        %371 = vmatprep.subr.mxu0 0.0
        %372 = vmatpush2.msra.mxu0 0.0
        %373 = vmatprep.subr.mxu0 0.0
        %374 = vmatpush2.msra.mxu0 0.0
        %375 = vmatprep.subr.mxu0 0.0
        %376 = vmatpush2.msra.mxu0 0.0
        %377 = vmatprep.subr.mxu0 0.0
        %378 = vmatpush2.msra.mxu0 0.0
        %379 = vmatprep.subr.mxu0 0.0
        %380 = vmatpush2.msra.mxu0 0.0
        %381 = vmatprep.mubr.f32.mxu0 0.0
        %382 = vmatmul.mubr.f32.gmra.mxu0 %v306
        %v383 = vpop.f32.mrf.mxu0
        %v384 = vadd.f32 %v303, %v383
        %v385 = vpop.f32.mrf.mxu0
        %386 = vmatprep.mubr.f32.mxu0 0.0
        %387 = vmatmul.mubr.f32.gmra.mxu0 %v309
        %v388 = vpop.f32.mrf.mxu0
        %v389 = vadd.f32 %v303, %v388
        %v390 = vpop.f32.mrf.mxu0
        %391 = vmatprep.mubr.f32.mxu0 0.0
        %392 = vmatmul.mubr.f32.gmra.mxu0 %v312
        %v393 = vpop.f32.mrf.mxu0
        %v394 = vadd.f32 %v303, %v393
        %v395 = vpop.f32.mrf.mxu0
        %396 = vmatprep.mubr.f32.mxu0 0.0
        %397 = vmatmul.mubr.f32.gmra.mxu0 %v315
        %v398 = vpop.f32.mrf.mxu0
        %v399 = vadd.f32 %v303, %v398
        %v400 = vpop.f32.mrf.mxu0
        %401 = vdwg.mxu0
        %402 = vadd.xlane.f32.xlu0 %v384
        %v403 = vpop.xlane.xlu0 %402
        %404 = vadd.xlane.f32.xlu0 %v389
        %v405 = vpop.xlane.xlu0 %404
        %406 = vadd.xlane.f32.xlu0 %v394
        %v407 = vpop.xlane.xlu0 %406
        %408 = vadd.xlane.f32.xlu0 %v399
        %v409 = vpop.xlane.xlu0 %408
        %v410 = vmul.f32 %v403, 0.03125
        %v411 = vmul.f32 %v405, 0.03125
        %v412 = vmul.f32 %v407, 0.03125
        %v413 = vmul.f32 %v409, 0.03125
        %v414 = vsub.f32 %v384, %v410
        %v415 = vsub.f32 %v389, %v411
        %v416 = vsub.f32 %v394, %v412
        %v417 = vsub.f32 %v399, %v413
        %v418 = vlaneseq
        %v419 = vshrl.u32 %v418, 7
        %v420 = vsub.s32 0, %v419
        %v421 = vrot.slane %v290, %v420
        %v422 = vmul.f32 %v414, %v421
        %v423 = vmul.f32 %v415, %v421
        %v424 = vmul.f32 %v416, %v421
        %v425 = vmul.f32 %v417, %v421
        %v426 = vmul.f32 %v422, %v422
        %v427 = vmul.f32 %v423, %v423
        %v428 = vmul.f32 %v424, %v424
        %v429 = vmul.f32 %v425, %v425
        %430 = vadd.xlane.f32.xlu0 %v426
        %v431 = vpop.xlane.xlu0 %430
        %432 = vadd.xlane.f32.xlu0 %v427
        %v433 = vpop.xlane.xlu0 %432
        %434 = vadd.xlane.f32.xlu0 %v428
        %v435 = vpop.xlane.xlu0 %434
        %436 = vadd.xlane.f32.xlu0 %v429
        %v437 = vpop.xlane.xlu0 %436
        %v438 = vmul.f32 %v431, 0.03125
        %v439 = vmul.f32 %v433, 0.03125
        %v440 = vmul.f32 %v435, 0.03125
        %v441 = vmul.f32 %v437, 0.03125
        %v442 = vadd.f32 %v438, 1e-05
        %v443 = vadd.f32 %v439, 1e-05
        %v444 = vadd.f32 %v440, 1e-05
        %v445 = vadd.f32 %v441, 1e-05
        %v446 = vrsqrt.pop %v442
        %v447 = vrsqrt.pop %v443
        %v448 = vrsqrt.pop %v444
        %v449 = vrsqrt.pop %v445
        %v450 = vmul.f32 %v422, %v446
        %v451 = vmul.f32 %v423, %v447
        %v452 = vmul.f32 %v424, %v448
        %v453 = vmul.f32 %v425, %v449
        %v454 = vlaneseq
        %v455 = vshrl.u32 %v454, 7
        %v456 = vsub.s32 0, %v455
        %v457 = vrot.slane %v296, %v456
        %v458 = vmul.f32 %v450, %v457
        %v459 = vmul.f32 %v451, %v457
        %v460 = vmul.f32 %v452, %v457
        %v461 = vmul.f32 %v453, %v457
        %v462 = vlaneseq
        %v463 = vshrl.u32 %v462, 7
        %v464 = vsub.s32 0, %v463
        %v465 = vrot.slane %v297, %v464
        %v466 = vadd.f32 %v458, %v465
        %v467 = vadd.f32 %v459, %v465
        %v468 = vadd.f32 %v460, %v465
        %v469 = vadd.f32 %v461, %v465
        %v470 = vmax.f32 %v466, 0.0
        %v471 = vmax.f32 %v467, 0.0
        %v472 = vmax.f32 %v468, 0.0
        %v473 = vmax.f32 %v469, 0.0
        %v474 = vld [vmem:[%s5 + $0x3] sm:$0x1]
        %v475 = vld [vmem:[%s5 + $0x4] sm:$0x1]
        %v476 = vld [vmem:[%s5 + $0x5] sm:$0x1]
        %v477 = vld [vmem:[%s3] sm:$0xff]
        %v478 = vld [vmem:[%s3 + $0x8] sm:$0xff]
        %v479 = vld [vmem:[%s3 + $0x10] sm:$0xff]
        %v480 = vld [vmem:[%s3 + $0x18] sm:$0xff]
        %v481 = vld [vmem:[%s3 + $0x20] sm:$0xff]
        %v482 = vld [vmem:[%s3 + $0x28] sm:$0xff]
        %v483 = vld [vmem:[%s3 + $0x30] sm:$0xff]
        %v484 = vld [vmem:[%s3 + $0x38] sm:$0xff]
        %v485 = vld [vmem:[%s3 + $0x40] sm:$0xff]
        %v486 = vld [vmem:[%s3 + $0x48] sm:$0xff]
        %v487 = vld [vmem:[%s3 + $0x50] sm:$0xff]
        %v488 = vld [vmem:[%s3 + $0x58] sm:$0xff]
        %v489 = vld [vmem:[%s3 + $0x60] sm:$0xff]
        %v490 = vld [vmem:[%s3 + $0x68] sm:$0xff]
        %v491 = vld [vmem:[%s3 + $0x70] sm:$0xff]
        %v492 = vld [vmem:[%s3 + $0x78] sm:$0xff]
        %v493 = vlaneseq
        %v494 = vshrl.u32 %v493, 7
        %v495 = vsub.s32 0, %v494
        %v496 = vrot.slane %v474, %v495
        %497 = vmatprep.subr.mxu0 0.0
        %498 = vmatpush1.msra.mxu0 %v492
        %499 = vmatprep.subr.mxu0 0.0
        %500 = vmatpush1.msra.mxu0 %v491
        %501 = vmatprep.subr.mxu0 0.0
        %502 = vmatpush1.msra.mxu0 %v490
        %503 = vmatprep.subr.mxu0 0.0
        %504 = vmatpush1.msra.mxu0 %v489
        %505 = vmatprep.subr.mxu0 0.0
        %506 = vmatpush1.msra.mxu0 %v488
        %507 = vmatprep.subr.mxu0 0.0
        %508 = vmatpush1.msra.mxu0 %v487
        %509 = vmatprep.subr.mxu0 0.0
        %510 = vmatpush1.msra.mxu0 %v486
        %511 = vmatprep.subr.mxu0 0.0
        %512 = vmatpush1.msra.mxu0 %v485
        %513 = vmatprep.subr.mxu0 0.0
        %514 = vmatpush1.msra.mxu0 %v484
        %515 = vmatprep.subr.mxu0 0.0
        %516 = vmatpush1.msra.mxu0 %v483
        %517 = vmatprep.subr.mxu0 0.0
        %518 = vmatpush1.msra.mxu0 %v482
        %519 = vmatprep.subr.mxu0 0.0
        %520 = vmatpush1.msra.mxu0 %v481
        %521 = vmatprep.subr.mxu0 0.0
        %522 = vmatpush1.msra.mxu0 %v480
        %523 = vmatprep.subr.mxu0 0.0
        %524 = vmatpush1.msra.mxu0 %v479
        %525 = vmatprep.subr.mxu0 0.0
        %526 = vmatpush1.msra.mxu0 %v478
        %527 = vmatprep.subr.mxu0 0.0
        %528 = vmatpush1.msra.mxu0 %v477
        %529 = vmatprep.subr.mxu0 0.0
        %530 = vmatpush2.msra.mxu0 0.0
        %531 = vmatprep.subr.mxu0 0.0
        %532 = vmatpush2.msra.mxu0 0.0
        %533 = vmatprep.subr.mxu0 0.0
        %534 = vmatpush2.msra.mxu0 0.0
        %535 = vmatprep.subr.mxu0 0.0
        %536 = vmatpush2.msra.mxu0 0.0
        %537 = vmatprep.subr.mxu0 0.0
        %538 = vmatpush2.msra.mxu0 0.0
        %539 = vmatprep.subr.mxu0 0.0
        %540 = vmatpush2.msra.mxu0 0.0
        %541 = vmatprep.subr.mxu0 0.0
        %542 = vmatpush2.msra.mxu0 0.0
        %543 = vmatprep.subr.mxu0 0.0
        %544 = vmatpush2.msra.mxu0 0.0
        %545 = vmatprep.subr.mxu0 0.0
        %546 = vmatpush2.msra.mxu0 0.0
        %547 = vmatprep.subr.mxu0 0.0
        %548 = vmatpush2.msra.mxu0 0.0
        %549 = vmatprep.subr.mxu0 0.0
        %550 = vmatpush2.msra.mxu0 0.0
        %551 = vmatprep.subr.mxu0 0.0
        %552 = vmatpush2.msra.mxu0 0.0
        %553 = vmatprep.subr.mxu0 0.0
        %554 = vmatpush2.msra.mxu0 0.0
        %555 = vmatprep.subr.mxu0 0.0
        %556 = vmatpush2.msra.mxu0 0.0
        %557 = vmatprep.subr.mxu0 0.0
        %558 = vmatpush2.msra.mxu0 0.0
        %559 = vmatprep.subr.mxu0 0.0
        %560 = vmatpush2.msra.mxu0 0.0
        %561 = vmatprep.mubr.f32.mxu0 0.0
        %562 = vmatmul.mubr.f32.gmra.mxu0 %v470
        %v563 = vpop.f32.mrf.mxu0
        %v564 = vadd.f32 %v496, %v563
        %v565 = vpop.f32.mrf.mxu0
        %566 = vmatprep.mubr.f32.mxu0 0.0
        %567 = vmatmul.mubr.f32.gmra.mxu0 %v471
        %v568 = vpop.f32.mrf.mxu0
        %v569 = vadd.f32 %v496, %v568
        %v570 = vpop.f32.mrf.mxu0
        %571 = vmatprep.mubr.f32.mxu0 0.0
        %572 = vmatmul.mubr.f32.gmra.mxu0 %v472
        %v573 = vpop.f32.mrf.mxu0
        %v574 = vadd.f32 %v496, %v573
        %v575 = vpop.f32.mrf.mxu0
        %576 = vmatprep.mubr.f32.mxu0 0.0
        %577 = vmatmul.mubr.f32.gmra.mxu0 %v473
        %v578 = vpop.f32.mrf.mxu0
        %v579 = vadd.f32 %v496, %v578
        %v580 = vpop.f32.mrf.mxu0
        %581 = vdwg.mxu0
        %582 = vadd.xlane.f32.xlu0 %v564
        %v583 = vpop.xlane.xlu0 %582
        %584 = vadd.xlane.f32.xlu0 %v569
        %v585 = vpop.xlane.xlu0 %584
        %586 = vadd.xlane.f32.xlu0 %v574
        %v587 = vpop.xlane.xlu0 %586
        %588 = vadd.xlane.f32.xlu0 %v579
        %v589 = vpop.xlane.xlu0 %588
        %v590 = vmul.f32 %v583, 0.03125
        %v591 = vmul.f32 %v585, 0.03125
        %v592 = vmul.f32 %v587, 0.03125
        %v593 = vmul.f32 %v589, 0.03125
        %v594 = vsub.f32 %v564, %v590
        %v595 = vsub.f32 %v569, %v591
        %v596 = vsub.f32 %v574, %v592
        %v597 = vsub.f32 %v579, %v593
        %v598 = vmul.f32 %v594, %v421
        %v599 = vmul.f32 %v595, %v421
        %v600 = vmul.f32 %v596, %v421
        %v601 = vmul.f32 %v597, %v421
        %v602 = vmul.f32 %v598, %v598
        %v603 = vmul.f32 %v599, %v599
        %v604 = vmul.f32 %v600, %v600
        %v605 = vmul.f32 %v601, %v601
        %606 = vadd.xlane.f32.xlu0 %v602
        %v607 = vpop.xlane.xlu0 %606
        %608 = vadd.xlane.f32.xlu0 %v603
        %v609 = vpop.xlane.xlu0 %608
        %610 = vadd.xlane.f32.xlu0 %v604
        %v611 = vpop.xlane.xlu0 %610
        %612 = vadd.xlane.f32.xlu0 %v605
        %v613 = vpop.xlane.xlu0 %612
        %v614 = vmul.f32 %v607, 0.03125
        %v615 = vmul.f32 %v609, 0.03125
        %v616 = vmul.f32 %v611, 0.03125
        %v617 = vmul.f32 %v613, 0.03125
        %v618 = vadd.f32 %v614, 1e-05
        %v619 = vadd.f32 %v615, 1e-05
        %v620 = vadd.f32 %v616, 1e-05
        %v621 = vadd.f32 %v617, 1e-05
        %v622 = vrsqrt.pop %v618
        %v623 = vrsqrt.pop %v619
        %v624 = vrsqrt.pop %v620
        %v625 = vrsqrt.pop %v621
        %v626 = vmul.f32 %v598, %v622
        %v627 = vmul.f32 %v599, %v623
        %v628 = vmul.f32 %v600, %v624
        %v629 = vmul.f32 %v601, %v625
        %v630 = vlaneseq
        %v631 = vshrl.u32 %v630, 7
        %v632 = vsub.s32 0, %v631
        %v633 = vrot.slane %v475, %v632
        %v634 = vmul.f32 %v626, %v633
        %v635 = vmul.f32 %v627, %v633
        %v636 = vmul.f32 %v628, %v633
        %v637 = vmul.f32 %v629, %v633
        %v638 = vlaneseq
        %v639 = vshrl.u32 %v638, 7
        %v640 = vsub.s32 0, %v639
        %v641 = vrot.slane %v476, %v640
        %v642 = vadd.f32 %v634, %v641
        %v643 = vadd.f32 %v635, %v641
        %v644 = vadd.f32 %v636, %v641
        %v645 = vadd.f32 %v637, %v641
        %v646 = vmax.f32 %v642, 0.0
        %v647 = vmax.f32 %v643, 0.0
        %v648 = vmax.f32 %v644, 0.0
        %v649 = vmax.f32 %v645, 0.0
        %v650 = vld [vmem:[#allocation2] sm:$0xff]
        %v651 = vld [vmem:[#allocation2 + $0x8] sm:$0xff]
        %v652 = vld [vmem:[#allocation2 + $0x10] sm:$0xff]
        %v653 = vld [vmem:[#allocation2 + $0x18] sm:$0xff]
        %v654 = vld [vmem:[#allocation2 + $0x20] sm:$0xff]
        %v655 = vld [vmem:[#allocation2 + $0x28] sm:$0xff]
        %v656 = vld [vmem:[#allocation2 + $0x30] sm:$0xff]
        %v657 = vld [vmem:[#allocation2 + $0x38] sm:$0xff]
        %v658 = vld [vmem:[#allocation2 + $0x40] sm:$0xff]
        %v659 = vld [vmem:[#allocation2 + $0x48] sm:$0xff]
        %v660 = vld [vmem:[#allocation2 + $0x50] sm:$0xff]
        %v661 = vld [vmem:[#allocation2 + $0x58] sm:$0xff]
        %v662 = vld [vmem:[#allocation2 + $0x60] sm:$0xff]
        %v663 = vld [vmem:[#allocation2 + $0x68] sm:$0xff]
        %v664 = vld [vmem:[#allocation2 + $0x70] sm:$0xff]
        %v665 = vld [vmem:[#allocation2 + $0x78] sm:$0xff]
        %v666 = vld [vmem:[%s5 + $0x6] sm:$0x1]
        %v667 = vlaneseq
        %v668 = vshrl.u32 %v667, 7
        %v669 = vsub.s32 0, %v668
        %v670 = vrot.slane %v666, %v669
        %671 = vmatprep.subr.mxu0 0.0
        %672 = vmatpush1.msra.mxu0 %v665
        %673 = vmatprep.subr.mxu0 0.0
        %674 = vmatpush1.msra.mxu0 %v664
        %675 = vmatprep.subr.mxu0 0.0
        %676 = vmatpush1.msra.mxu0 %v663
        %677 = vmatprep.subr.mxu0 0.0
        %678 = vmatpush1.msra.mxu0 %v662
        %679 = vmatprep.subr.mxu0 0.0
        %680 = vmatpush1.msra.mxu0 %v661
        %681 = vmatprep.subr.mxu0 0.0
        %682 = vmatpush1.msra.mxu0 %v660
        %683 = vmatprep.subr.mxu0 0.0
        %684 = vmatpush1.msra.mxu0 %v659
        %685 = vmatprep.subr.mxu0 0.0
        %686 = vmatpush1.msra.mxu0 %v658
        %687 = vmatprep.subr.mxu0 0.0
        %688 = vmatpush1.msra.mxu0 %v657
        %689 = vmatprep.subr.mxu0 0.0
        %690 = vmatpush1.msra.mxu0 %v656
        %691 = vmatprep.subr.mxu0 0.0
        %692 = vmatpush1.msra.mxu0 %v655
        %693 = vmatprep.subr.mxu0 0.0
        %694 = vmatpush1.msra.mxu0 %v654
        %695 = vmatprep.subr.mxu0 0.0
        %696 = vmatpush1.msra.mxu0 %v653
        %697 = vmatprep.subr.mxu0 0.0
        %698 = vmatpush1.msra.mxu0 %v652
        %699 = vmatprep.subr.mxu0 0.0
        %700 = vmatpush1.msra.mxu0 %v651
        %701 = vmatprep.subr.mxu0 0.0
        %702 = vmatpush1.msra.mxu0 %v650
        %703 = vmatprep.subr.mxu0 0.0
        %704 = vmatpush2.msra.mxu0 0.0
        %705 = vmatprep.subr.mxu0 0.0
        %706 = vmatpush2.msra.mxu0 0.0
        %707 = vmatprep.subr.mxu0 0.0
        %708 = vmatpush2.msra.mxu0 0.0
        %709 = vmatprep.subr.mxu0 0.0
        %710 = vmatpush2.msra.mxu0 0.0
        %711 = vmatprep.subr.mxu0 0.0
        %712 = vmatpush2.msra.mxu0 0.0
        %713 = vmatprep.subr.mxu0 0.0
        %714 = vmatpush2.msra.mxu0 0.0
        %715 = vmatprep.subr.mxu0 0.0
        %716 = vmatpush2.msra.mxu0 0.0
        %717 = vmatprep.subr.mxu0 0.0
        %718 = vmatpush2.msra.mxu0 0.0
        %719 = vmatprep.subr.mxu0 0.0
        %720 = vmatpush2.msra.mxu0 0.0
        %721 = vmatprep.subr.mxu0 0.0
        %722 = vmatpush2.msra.mxu0 0.0
        %723 = vmatprep.subr.mxu0 0.0
        %724 = vmatpush2.msra.mxu0 0.0
        %725 = vmatprep.subr.mxu0 0.0
        %726 = vmatpush2.msra.mxu0 0.0
        %727 = vmatprep.subr.mxu0 0.0
        %728 = vmatpush2.msra.mxu0 0.0
        %729 = vmatprep.subr.mxu0 0.0
        %730 = vmatpush2.msra.mxu0 0.0
        %731 = vmatprep.subr.mxu0 0.0
        %732 = vmatpush2.msra.mxu0 0.0
        %733 = vmatprep.subr.mxu0 0.0
        %734 = vmatpush2.msra.mxu0 0.0
        %735 = vmatprep.mubr.f32.mxu0 0.0
        %736 = vmatmul.mubr.f32.gmra.mxu0 %v646
        %v737 = vpop.f32.mrf.mxu0
        %v738 = vadd.f32 %v670, %v737
        %v739 = vpop.f32.mrf.mxu0
        %740 = vmatprep.mubr.f32.mxu0 0.0
        %741 = vmatmul.mubr.f32.gmra.mxu0 %v647
        %v742 = vpop.f32.mrf.mxu0
        %v743 = vadd.f32 %v670, %v742
        %v744 = vpop.f32.mrf.mxu0
        %745 = vmatprep.mubr.f32.mxu0 0.0
        %746 = vmatmul.mubr.f32.gmra.mxu0 %v648
        %v747 = vpop.f32.mrf.mxu0
        %v748 = vadd.f32 %v670, %v747
        %v749 = vpop.f32.mrf.mxu0
        %750 = vmatprep.mubr.f32.mxu0 0.0
        %751 = vmatmul.mubr.f32.gmra.mxu0 %v649
        %v752 = vpop.f32.mrf.mxu0
        %v753 = vadd.f32 %v670, %v752
        %v754 = vpop.f32.mrf.mxu0
        %755 = vdwg.mxu0
        %756 = vst [vmem:[%s276] sm:$0xff] %v738
        %757 = vst [vmem:[%s276 + $0x10] sm:$0xff] %v743
        %758 = vst [vmem:[%s276 + $0x20] sm:$0xff] %v748
        %759 = vst [vmem:[%s276 + $0x30] sm:$0xff] %v753
        %v760 = vtanh.pop %v738
        %v761 = vtanh.pop %v743
        %v762 = vtanh.pop %v748
        %v763 = vtanh.pop %v753
        %v764 = vld [vmem:[%s5 + $0x7] sm:$0x1]
        %v765 = vlaneseq
        %v766 = vshrl.u32 %v765, 7
        %v767 = vsub.s32 0, %v766
        %v768 = vrot.slane %v764, %v767
        %v769 = vmul.f32 %v760, %v768
        %v770 = vmul.f32 %v761, %v768
        %v771 = vmul.f32 %v762, %v768
        %v772 = vmul.f32 %v763, %v768
        %v773 = vld [vmem:[%s5 + $0x8] sm:$0x1]
        %v774 = vlaneseq
        %v775 = vshrl.u32 %v774, 7
        %v776 = vsub.s32 0, %v775
        %v777 = vrot.slane %v773, %v776
        %v778 = vadd.f32 %v769, %v777
        %v779 = vadd.f32 %v770, %v777
        %v780 = vadd.f32 %v771, %v777
        %v781 = vadd.f32 %v772, %v777
        %v782 = vmax.f32 %v738, -20.0
        %v783 = vmax.f32 %v743, -20.0
        %v784 = vmax.f32 %v748, -20.0
        %v785 = vmax.f32 %v753, -20.0
        %v786 = vmin.f32 %v782, 2.0
        %v787 = vmin.f32 %v783, 2.0
        %v788 = vmin.f32 %v784, 2.0
        %v789 = vmin.f32 %v785, 2.0
        %v790 = vmul.f32 %v786, 1.442695
        %v791 = vpow.pop %v790
        %v792 = vmul.f32 %v787, 1.442695
        %v793 = vpow.pop %v792
        %v794 = vmul.f32 %v788, 1.442695
        %v795 = vpow.pop %v794
        %v796 = vmul.f32 %v789, 1.442695
        %v797 = vpow.pop %v796
        %v798 = vld [vmem:[%s287] sm:$0xff]
        %v799 = vld [vmem:[%s287 + $0x8] sm:$0xff]
        %v800 = vld [vmem:[%s287 + $0x10] sm:$0xff]
        %v801 = vld [vmem:[%s287 + $0x18] sm:$0xff]
        %v802 = vmul.f32 %v791, %v798
        %v803 = vmul.f32 %v793, %v799
        %v804 = vmul.f32 %v795, %v800
        %v805 = vmul.f32 %v797, %v801
        %v806 = vadd.f32 %v778, %v802
        %v807 = vadd.f32 %v779, %v803
        %v808 = vadd.f32 %v780, %v804
        %v809 = vadd.f32 %v781, %v805
        %vm810 = vcmask 64512
        %811 = vst.msk [vmem:[%s276 + $0x8] sm:$0xff] %vm810, %v806
        %812 = vst.msk [vmem:[%s276 + $0x18] sm:$0xff] %vm810, %v807
        %813 = vst.msk [vmem:[%s276 + $0x28] sm:$0xff] %vm810, %v808
        %814 = vst.msk [vmem:[%s276 + $0x38] sm:$0xff] %vm810, %v809
        %s815 = sand.u32 %s165, 1
        %s816 = scalar_lea.sflag [#allocation4], %s815
        %s817 = sand.u32 %s165, 1
        %s818 = smul.addr %s817, 64
        %s819 = scalar_lea.vmem [#allocation5], %s818
        // Predicated region
        $region49: #{tpu_custom_call.1} parent=43 // pred_check
          %p820 = pneg %p175
        $region50: #{tpu_custom_call.1} parent=43 // pred_check_branch
          %822 = sbr.rel (%p820) target = $region52
        $region51: #{tpu_custom_call.1} parent=43 // pred_region
          %s823 = smul.u32 4, %s21
          %s825 = ssub.s32 1024, 1024
          %826 = vsyncadd %s816, %s825
          %s827 = smul.addr %s823, 2
          %s828 = smul.addr %s827, 128
          %s829 = scalar_lea.hbm %s6, %s828
          %s830 = sshll.u32 %s819, 4
          %s831 = int_to_ptr.vmem [resolvable:$true] %s830
          %836 = dma.vmem_to_hbm [thread:$0]  %s831, 1024, %s829, %s816, 256, 256, 16
        $region52: #{tpu_custom_call.1} parent=43 // pred_fallthru
          _
      $region44: #{tpu_custom_call.1} parent=5 // pred_fallthru
        _
      %p837 = scmp.le.s32.totalorder 2, %s16
      // Predicated region
      $region53: #{tpu_custom_call.1} parent=5 // pred_check
        %p838 = pneg %p837
      $region54: #{tpu_custom_call.1} parent=5 // pred_check_branch
        %840 = sbr.rel (%p838) target = $region56
      $region55: #{tpu_custom_call.1} parent=5 // pred_region
        %s841 = ssub.s32 %s16, 2
        // Predicated region
        $region57: #{tpu_custom_call.1} parent=55 // pred_check
          %p842 = pneg %p181
        $region58: #{tpu_custom_call.1} parent=55 // pred_check_branch
          %844 = sbr.rel (%p842) target = $region60
        $region59: #{tpu_custom_call.1} parent=55 // pred_region
          %s845 = sand.u32 %s166, 1
          %s846 = scalar_lea.sflag [#allocation4], %s845
          %s847 = sand.u32 %s166, 1
          %s848 = smul.addr %s847, 64
          %s849 = scalar_lea.vmem [#allocation5], %s848
          %850 = dma.done %s846, 1024
        $region60: #{tpu_custom_call.1} parent=55 // pred_fallthru
          _
      $region56: #{tpu_custom_call.1} parent=5 // pred_fallthru
        _
    $region6: #{tpu_custom_call.1} parent=1 // loop_footer
      %s20 = sadd.s32 1, %s16
    $region7: #{tpu_custom_call.1} parent=1 // loop_footer_branch
      %15 = sbr.rel target = $region3
    $region8: #{tpu_custom_call.1} parent=1 // loop_exit
      _
    %851 = vsyncpa [#allocation3], 1
    %s852 = scalar_lea.sflag [#allocation3], 1
    %853 = vsyncpa %s852, 1
    %854 = vsyncpa [#allocation4], 1
    %s855 = scalar_lea.sflag [#allocation4], 1
    %856 = vsyncpa %s855, 1

</llo_original>
